<compile_context>
chip_gen: v5e
topology: v5e:2x2
jax: 0.10.0
libtpu: 0.0.40
codegen_flags: <defaults>
</compile_context>

<pallas_src>
import jax
import jax.numpy as jnp
from jax.experimental import pallas as pl
from jax.experimental.pallas import tpu as pltpu


def _denoise_normalize_kernel(x_ref, o_ref):
    # x / 0.5 - 1  ==  2*x - 1   (bit-exact)
    o_ref[...] = x_ref[...] * 2.0 - 1.0


def _pick_lanes(hw: int) -> int:
    """Largest of (512, 256, 128) dividing H*W, else the full spatial extent."""
    for lanes in (512, 256, 128):
        if hw % lanes == 0:
            return lanes
    return hw  # block dim == full array dim is always legal (masked stores)


def _pick_row_tile(rows: int, cap: int) -> int:
    """Divisor of `rows` that is <= cap and a multiple of 8, else full rows."""
    if rows <= cap:
        return rows
    for d in range(min(rows, cap), 7, -1):
        if rows % d == 0 and d % 8 == 0:
            return d
    return rows


def _pick_batch_tile(n: int, cap: int) -> int:
    cap = max(1, min(n, cap))
    for d in range(cap, 0, -1):
        if n % d == 0:
            return d
    return 1


def denoise_normalize(x: jax.Array) -> jax.Array:
    """Pallas equivalent of Denoise_NormalizeLayer.forward (NCHW input)."""
    N, C, H, W = x.shape
    assert C >= 3, "Denoise_NormalizeLayer selects channels [2, 1, 0]"
    C_OUT = 3  # output always has 3 channels (BGR), like the PyTorch gather
    HW = H * W

    # Lane-dense view of the spatial dims.
    lanes = _pick_lanes(HW)
    rows = HW // lanes
    x4 = x.reshape(N, C, rows, lanes)

    # Fatten blocks toward ~2 MiB per buffer: row tile first, then batch tile.
    elem_bytes = jnp.dtype(x.dtype).itemsize
    target_elems = max(1, (2 * 1024 * 1024) // elem_bytes)
    row_tile = _pick_row_tile(rows, max(1, target_elems // lanes))
    n_tile = _pick_batch_tile(N, max(1, target_elems // (lanes * row_tile)))

    grid = (N // n_tile, C_OUT, rows // row_tile)
    block = (n_tile, 1, row_tile, lanes)

    out4 = pl.pallas_call(
        _denoise_normalize_kernel,
        out_shape=jax.ShapeDtypeStruct((N, C_OUT, rows, lanes), x.dtype),
        grid=grid,
        in_specs=[
            # Output channel c is fed from input channel perm[c] = 2 - c.
            pl.BlockSpec(block, lambda nb, c, rb: (nb, 2 - c, rb, 0)),
        ],
        out_specs=pl.BlockSpec(block, lambda nb, c, rb: (nb, c, rb, 0)),
        compiler_params=pltpu.CompilerParams(
            dimension_semantics=("parallel", "parallel", "parallel")
        ),
    )(x4)

    return out4.reshape(N, C_OUT, H, W)


if __name__ == "__main__":
    key = jax.random.PRNGKey(0)

    # Module is built for 3-channel RGB images (permute [2, 1, 0]).
    N, C, H, W = 2, 3, 16, 16
    x = jax.random.uniform(key, (N, C, H, W), dtype=jnp.float32)

    out = denoise_normalize(x)
    out = jax.block_until_ready(out)

    # Reference: gather channels [2, 1, 0], then x / 0.5 - 1.
    ref = x[:, jnp.array([2, 1, 0]), :, :] / 0.5 - 1.0
    assert out.shape == ref.shape
    assert out.dtype == x.dtype
    assert jnp.allclose(out, ref, atol=1e-6, rtol=1e-6)

    print("KERNEL_OK")
</pallas_src>

<mosaic_0001>
module attributes {stable_mosaic.version = 11 : i64} {
  func.func @_denoise_normalize_kernel(%arg0: i32, %arg1: i32, %arg2: i32, %arg3: memref<2x1x1x256xf32, #tpu.memory_space<vmem>>, %arg4: memref<2x1x1x256xf32, #tpu.memory_space<vmem>>) attributes {dimension_semantics = [#tpu.dimension_semantics<parallel>, #tpu.dimension_semantics<parallel>, #tpu.dimension_semantics<parallel>], iteration_bounds = array<i64: 1, 3, 1>, scalar_prefetch = 0 : i64, scratch_operands = 0 : i64, tpu.core_type = #tpu.core_type<tc>, window_params = [{transform_indices = @transform_0, window_bounds = array<i64: 2, 1, 1, 256>}, {transform_indices = @transform_1, window_bounds = array<i64: 2, 1, 1, 256>}]} {
    %c0 = arith.constant 0 : index
    %c0_0 = arith.constant 0 : index
    %c0_1 = arith.constant 0 : index
    %c0_2 = arith.constant 0 : index
    %0 = vector.load %arg3[%c0, %c0_0, %c0_1, %c0_2] : memref<2x1x1x256xf32, #tpu.memory_space<vmem>>, vector<2x1x1x256xf32>
    %cst = arith.constant 2.000000e+00 : f32
    %1 = vector.broadcast %cst : f32 to vector<2x1x1x256xf32>
    %2 = arith.mulf %0, %1 : vector<2x1x1x256xf32>
    %cst_3 = arith.constant 1.000000e+00 : f32
    %3 = vector.broadcast %cst_3 : f32 to vector<2x1x1x256xf32>
    %4 = arith.subf %2, %3 : vector<2x1x1x256xf32>
    %c0_4 = arith.constant 0 : index
    %c0_5 = arith.constant 0 : index
    %c0_6 = arith.constant 0 : index
    %c0_7 = arith.constant 0 : index
    %5 = vector.load %arg4[%c0_4, %c0_5, %c0_6, %c0_7] : memref<2x1x1x256xf32, #tpu.memory_space<vmem>>, vector<2x1x1x256xf32>
    tpu.vector_store %arg4[%c0_4, %c0_5, %c0_6, %c0_7], %4 {strides = array<i32>} : memref<2x1x1x256xf32, #tpu.memory_space<vmem>>, vector<2x1x1x256xf32>,
    return
  }
  func.func @transform_0(%arg0: i32, %arg1: i32, %arg2: i32) -> (i32, i32, i32, i32) {
    %c2_i32 = arith.constant 2 : i32
    %0 = arith.subi %c2_i32, %arg1 : i32
    %c0_i32 = arith.constant 0 : i32
    %c0_i32_0 = arith.constant 0 : i32
    return %arg0, %0, %arg2, %c0_i32 : i32, i32, i32, i32
  }
  func.func @transform_1(%arg0: i32, %arg1: i32, %arg2: i32) -> (i32, i32, i32, i32) {
    %c0_i32 = arith.constant 0 : i32
    %c0_i32_0 = arith.constant 0 : i32
    return %arg0, %arg1, %arg2, %c0_i32 : i32, i32, i32, i32
  }
}

</mosaic_0001>

<llo_original>
// kernel: tpu_custom_call.1
$region0: #{tpu_custom_call.1}
  #allocation0 [shape = 'u32[]', space=smem, size = 0x4, offset = 0x4, fixed_abs, tag = 'smem constant byte address 0x4 - core index']
  #allocation1 [shape = 'u32[72,128]{1,0:T(1,128)}', space=vmem, size = 0x9000, scoped, tag = 'internal scratch']
  %s0 = inlined_call_operand.hbm [shape: f32[2,3,1,256], index: 0, kind: input, shape index: {}]
  %s1 = inlined_call_operand.hbm [shape: f32[2,3,1,256], index: 1, kind: output, shape index: {}]
  %s2 = sld [smem:[#allocation0]]
  $region41: #{tpu_custom_call.1} parent=0
    _
  %s4 = ssub.s32 1, %s2
  %s5 = scalar_select 0, %s4, %s2
  $region1: #{tpu_custom_call.1} parent=0
    #allocation2 [shape = 'u8[4096]{0}', space=vmem, size = 0x1000, scoped, tag = 'input window, operand 0']
    #allocation3 [shape = 's32[2]{0}', space=sflag, size = 0x8, scoped, tag = 'scoped memory for tpu_custom_call.1']
    #allocation4 [shape = 's32[2]{0}', space=sflag, size = 0x8, scoped, tag = 'scoped memory for tpu_custom_call.1']
    #allocation5 [shape = 'u8[4096]{0}', space=vmem, size = 0x1000, scoped, tag = 'output window, operand 0']
    %6 = vsyncpa [#allocation3], 0
    %s7 = scalar_lea.sflag [#allocation3], 1
    %8 = vsyncpa %s7, 0
    %9 = vsyncpa [#allocation4], 0
    %s10 = scalar_lea.sflag [#allocation4], 1
    %11 = vsyncpa %s10, 0
    loop: start=0, step=1, limit=5
    $region2: #{tpu_custom_call.1} parent=1 // loop_pre_header
      _
    $region3: #{tpu_custom_call.1} parent=1 // loop_header
      %s13 = sphi 0, %s17
      %p14 = scmp.ge.s32.totalorder %s13, 5
      %s20 = sphi 0, %s39
      %s21 = sphi 0, %s35
      %s22 = sphi 0, %s31
      %s23 = sphi 0, %s20
      %s24 = sphi 0, %s21
      %s25 = sphi 0, %s22
      %s26 = sphi 0, %s23
      %s27 = sphi 0, %s24
      %s28 = sphi 0, %s25
      %s48 = sphi 0, %s50
      %s51 = sphi 0, %s48
      %s52 = sphi 0, %s51
      %s68 = sphi 0, %s52
      %s78 = sphi 0, %s80
      %s81 = sphi 0, %s78
      %s82 = sphi 0, %s81
      %s98 = sphi 0, %s82
    $region4: #{tpu_custom_call.1} parent=1 // loop_header_branch
      %16 = sbr.rel (%p14) target = $region8
    $region5: #{tpu_custom_call.1} parent=1 // loop_body
      %s18 = ssub.s32 %s13, 1
      %s19 = ssub.s32 %s13, 2
      %s29 = sadd.s32 1, %s22
      %p30 = scmp.ge.s32.totalorder %s29, 1
      %s31 = scalar_select %p30, 0, %s29
      %s32 = sadd.s32 1, %s21
      %s33 = scalar_select %p30, %s32, %s21
      %p34 = scmp.ge.s32.totalorder %s33, 3
      %s35 = scalar_select %p34, 0, %s33
      %s36 = sadd.s32 1, %s20
      %s37 = scalar_select %p34, %s36, %s20
      %p38 = scmp.ge.s32.totalorder %s37, 1
      %s39 = scalar_select %p38, 0, %s37
      %s40 = ssub.s32 2, %s21
      %s41 = ssub.s32 2, %s35
      %s42 = ssub.s32 %s20, %s39
      %s43 = ssub.s32 %s40, %s41
      %s44 = sor.u32 %s42, %s43
      %s45 = ssub.s32 %s22, %s31
      %s46 = sor.u32 %s44, %s45
      %p47 = scmp.eq.s32.totalorder %s46, 0
      %s49 = sadd.s32 %s48, 1
      %s50 = scalar_select %p47, %s48, %s49
      %p53 = pneg %p47
      %p54 = scmp.eq.s32.totalorder %s13, 2
      %p55 = por %p53, %p54
      %p56 = scmp.ne.s32.totalorder %s48, %s51
      %p57 = scmp.eq.s32.totalorder %s13, 0
      %p58 = por %p56, %p57
      %p59 = scmp.ne.s32.totalorder %s48, %s51
      %p60 = scmp.eq.s32.totalorder %s18, 2
      %p61 = por %p59, %p60
      %p62 = scmp.ne.s32.totalorder %s51, %s52
      %p63 = scmp.eq.s32.totalorder %s18, 0
      %p64 = por %p62, %p63
      %p65 = scmp.ne.s32.totalorder %s51, %s52
      %p66 = scmp.eq.s32.totalorder %s19, 2
      %p67 = por %p65, %p66
      %p69 = scmp.ne.s32.totalorder %s52, %s68
      %p70 = scmp.eq.s32.totalorder %s19, 0
      %p71 = por %p69, %p70
      %s72 = ssub.s32 %s20, %s39
      %s73 = ssub.s32 %s21, %s35
      %s74 = sor.u32 %s72, %s73
      %s75 = ssub.s32 %s22, %s31
      %s76 = sor.u32 %s74, %s75
      %p77 = scmp.eq.s32.totalorder %s76, 0
      %s79 = sadd.s32 %s78, 1
      %s80 = scalar_select %p77, %s78, %s79
      %p83 = pneg %p77
      %p84 = scmp.eq.s32.totalorder %s13, 2
      %p85 = por %p83, %p84
      %p86 = scmp.ne.s32.totalorder %s78, %s81
      %p87 = scmp.eq.s32.totalorder %s13, 0
      %p88 = por %p86, %p87
      %p89 = scmp.ne.s32.totalorder %s78, %s81
      %p90 = scmp.eq.s32.totalorder %s18, 2
      %p91 = por %p89, %p90
      %p92 = scmp.ne.s32.totalorder %s81, %s82
      %p93 = scmp.eq.s32.totalorder %s18, 0
      %p94 = por %p92, %p93
      %p95 = scmp.ne.s32.totalorder %s81, %s82
      %p96 = scmp.eq.s32.totalorder %s19, 2
      %p97 = por %p95, %p96
      %p99 = scmp.ne.s32.totalorder %s82, %s98
      %p100 = scmp.eq.s32.totalorder %s19, 0
      %p101 = por %p99, %p100
      %p102 = scmp.le.s32.totalorder 1, %s13
      %p103 = scmp.lt.s32.totalorder %s13, 4
      %p104 = pnand %p102, %p103
      %p105 = pneg %p104
      // Predicated region
      $region9: #{tpu_custom_call.1} parent=5 // pred_check
        _
      $region10: #{tpu_custom_call.1} parent=5 // pred_check_branch
        %107 = sbr.rel (%p104) target = $region12
      $region11: #{tpu_custom_call.1} parent=5 // pred_region
        %s108 = ssub.s32 %s13, 1
      $region12: #{tpu_custom_call.1} parent=5 // pred_fallthru
        _
      %p109 = scmp.lt.s32.totalorder %s13, 3
      // Predicated region
      $region13: #{tpu_custom_call.1} parent=5 // pred_check
        %p110 = pneg %p109
      $region14: #{tpu_custom_call.1} parent=5 // pred_check_branch
        %112 = sbr.rel (%p110) target = $region16
      $region15: #{tpu_custom_call.1} parent=5 // pred_region
        // Predicated region
        $region17: #{tpu_custom_call.1} parent=15 // pred_check
          %p113 = pneg %p58
        $region18: #{tpu_custom_call.1} parent=15 // pred_check_branch
          %115 = sbr.rel (%p113) target = $region20
        $region19: #{tpu_custom_call.1} parent=15 // pred_region
          %s116 = sand.u32 %s48, 1
          %s117 = scalar_lea.sflag [#allocation3], %s116
          %s118 = sand.u32 %s48, 1
          %s119 = smul.addr %s118, 4
          %s120 = scalar_lea.vmem [#allocation2], %s119
          %s121 = ssub.s32 2, %s21
          %s122 = smul.u32 2, %s20
          %124 = vsyncadd %s117, 0
          %s125 = smul.addr %s22, 2
          %s126 = smul.addr %s121, 2
          %s127 = sadd.s32 %s125, %s126
          %s128 = smul.addr %s122, 6
          %s129 = sadd.s32 %s127, %s128
          %s130 = scalar_lea.hbm %s0, %s129
          %s131 = sshll.u32 %s130, 4
          %s132 = int_to_ptr.hbm [resolvable:$true] %s131
          %s133 = sshll.u32 %s120, 4
          %s134 = int_to_ptr.vmem [resolvable:$true] %s133
          %139 = dma.hbm_to_vmem [thread:$0]  %s132, 64, %s134, %s117, 96, 32, 2
        $region20: #{tpu_custom_call.1} parent=15 // pred_fallthru
          _
      $region16: #{tpu_custom_call.1} parent=5 // pred_fallthru
        _
      %p140 = scmp.le.s32.totalorder 1, %s13
      %p141 = scmp.lt.s32.totalorder %s13, 4
      %p142 = pnand %p140, %p141
      %p143 = pneg %p142
      // Predicated region
      $region21: #{tpu_custom_call.1} parent=5 // pred_check
        _
      $region22: #{tpu_custom_call.1} parent=5 // pred_check_branch
        %145 = sbr.rel (%p142) target = $region24
      $region23: #{tpu_custom_call.1} parent=5 // pred_region
        %s146 = ssub.s32 %s13, 1
        %s147 = sand.u32 %s51, 1
        %s148 = scalar_lea.sflag [#allocation3], %s147
        %s149 = sand.u32 %s51, 1
        %s150 = smul.addr %s149, 4
        %s151 = scalar_lea.vmem [#allocation2], %s150
        // Predicated region
        $region25: #{tpu_custom_call.1} parent=23 // pred_check
          %p152 = pneg %p64
        $region26: #{tpu_custom_call.1} parent=23 // pred_check_branch
          %154 = sbr.rel (%p152) target = $region28
        $region27: #{tpu_custom_call.1} parent=23 // pred_region
          %156 = dma.done %s148, 64
        $region28: #{tpu_custom_call.1} parent=23 // pred_fallthru
          _
        %s157 = sand.u32 %s51, 1
        %s158 = scalar_lea.sflag [#allocation3], %s157
        %s159 = sand.u32 %s51, 1
        %s160 = smul.addr %s159, 4
        %s161 = scalar_lea.vmem [#allocation2], %s160
        %p162 = pneg %p64
        %p163 = pneg %p61
        %p164 = pneg %p94
        %p165 = pneg %p91
        %s166 = sand.u32 %s81, 1
        %s167 = scalar_lea.sflag [#allocation4], %s166
        %s168 = sand.u32 %s81, 1
        %s169 = smul.addr %s168, 4
        %s170 = scalar_lea.vmem [#allocation5], %s169
        %s171 = ssub.s32 2, %s24
        %s172 = smul.u32 2, %s23
        %s173 = smul.u32 2, %s23
        %v174 = vld [vmem:[%s151] sm:$0x3]
        %v175 = vld [vmem:[%s151 + $0x2] sm:$0x3]
        %v176 = vmul.f32 %v174, 2.0
        %v177 = vmul.f32 %v175, 2.0
        %v178 = vsub.f32 %v176, 1.0
        %v179 = vsub.f32 %v177, 1.0
        %v180 = vlaneseq
        %vm181 = vcmp.ge.s32.totalorder %v180, 0
        %vm182 = vcmp.lt.s32.totalorder %v180, 256
        %vm183 = vmand %vm181, %vm182
        %184 = vst.msk [vmem:[%s170] sm:$0x3] %vm183, %v178
        %185 = vst.msk [vmem:[%s170 + $0x2] sm:$0x3] %vm183, %v179
        %s186 = sand.u32 %s81, 1
        %s187 = scalar_lea.sflag [#allocation4], %s186
        %s188 = sand.u32 %s81, 1
        %s189 = smul.addr %s188, 4
        %s190 = scalar_lea.vmem [#allocation5], %s189
        // Predicated region
        $region29: #{tpu_custom_call.1} parent=23 // pred_check
          %p191 = pneg %p91
        $region30: #{tpu_custom_call.1} parent=23 // pred_check_branch
          %193 = sbr.rel (%p191) target = $region32
        $region31: #{tpu_custom_call.1} parent=23 // pred_region
          %s194 = smul.u32 2, %s23
          %196 = vsyncadd %s187, 0
          %s197 = smul.addr %s25, 2
          %s198 = smul.addr %s24, 2
          %s199 = sadd.s32 %s197, %s198
          %s200 = smul.addr %s194, 6
          %s201 = sadd.s32 %s199, %s200
          %s202 = scalar_lea.hbm %s1, %s201
          %s203 = sshll.u32 %s190, 4
          %s204 = int_to_ptr.vmem [resolvable:$true] %s203
          %s205 = sshll.u32 %s202, 4
          %s206 = int_to_ptr.hbm [resolvable:$true] %s205
          %211 = dma.vmem_to_hbm [thread:$0]  %s204, 64, %s206, %s187, 32, 96, 2
        $region32: #{tpu_custom_call.1} parent=23 // pred_fallthru
          _
      $region24: #{tpu_custom_call.1} parent=5 // pred_fallthru
        _
      %p212 = scmp.le.s32.totalorder 2, %s13
      // Predicated region
      $region33: #{tpu_custom_call.1} parent=5 // pred_check
        %p213 = pneg %p212
      $region34: #{tpu_custom_call.1} parent=5 // pred_check_branch
        %215 = sbr.rel (%p213) target = $region36
      $region35: #{tpu_custom_call.1} parent=5 // pred_region
        %s216 = ssub.s32 %s13, 2
        // Predicated region
        $region37: #{tpu_custom_call.1} parent=35 // pred_check
          %p217 = pneg %p97
        $region38: #{tpu_custom_call.1} parent=35 // pred_check_branch
          %219 = sbr.rel (%p217) target = $region40
        $region39: #{tpu_custom_call.1} parent=35 // pred_region
          %s220 = sand.u32 %s82, 1
          %s221 = scalar_lea.sflag [#allocation4], %s220
          %s222 = sand.u32 %s82, 1
          %s223 = smul.addr %s222, 4
          %s224 = scalar_lea.vmem [#allocation5], %s223
          %226 = dma.done %s221, 64
        $region40: #{tpu_custom_call.1} parent=35 // pred_fallthru
          _
      $region36: #{tpu_custom_call.1} parent=5 // pred_fallthru
        _
    $region6: #{tpu_custom_call.1} parent=1 // loop_footer
      %s17 = sadd.s32 1, %s13
    $region7: #{tpu_custom_call.1} parent=1 // loop_footer_branch
      %12 = sbr.rel target = $region3
    $region8: #{tpu_custom_call.1} parent=1 // loop_exit
      _
    %227 = vsyncpa [#allocation3], 1
    %s228 = scalar_lea.sflag [#allocation3], 1
    %229 = vsyncpa %s228, 1
    %230 = vsyncpa [#allocation4], 1
    %s231 = scalar_lea.sflag [#allocation4], 1
    %232 = vsyncpa %s231, 1

</llo_original>
